<compile_context>
chip_gen: v6e
topology: v6e:2x2x1
jax: 0.10.0
libtpu: 0.0.40
codegen_flags: <defaults>
</compile_context>

<pallas_src>
import jax
import jax.numpy as jnp
from jax.experimental import pallas as pl
from jax.experimental.pallas import tpu as pltpu

FEAT = 28 * 28                    # 784 lanes per image (free reshape of NCHW input)
POOLED = 14 * 14                  # 196 pooled features
K_SPREAD = 56 * 13 + 2 * 13 + 1   # 755 = last valid pooled lane + 1
N_OUT = 10
N_PAD = 128                       # lane-dense output / MXU N dimension


def net_kernel(scale_ref, x_ref, w_ref, b_ref, o_ref):
    # 2x2 stride-2 max pool, computed per lane: lane L gets the max over the
    # 2x2 window whose top-left pixel lives at lane L of the 28x28 image.
    v00 = x_ref[:, pl.ds(0, K_SPREAD)]
    v01 = x_ref[:, pl.ds(1, K_SPREAD)]
    v10 = x_ref[:, pl.ds(28, K_SPREAD)]
    v11 = x_ref[:, pl.ds(29, K_SPREAD)]
    pooled = jnp.maximum(jnp.maximum(v00, v01), jnp.maximum(v10, v11))

    # torch.where(x > 0, 1.0, -1.0); +/-1 is exact in bf16 -> full-rate MXU.
    xb = jnp.where(pooled > 0.0, 1.0, -1.0).astype(jnp.bfloat16)

    # TODO(synk): BCLinear is not provided in the snippet; assumed to be a
    # BinaryConnect linear (sign-binarized weight, real bias).  The binarized,
    # lane-scattered weight is precomputed in the wrapper (rows at non-pooled
    # lanes are zero), so garbage lanes of xb contribute nothing.
    acc = jnp.dot(xb, w_ref[...], preferred_element_type=jnp.float32)

    # (x @ Wb + bias) / temp  ==  acc * (1/temp) + bias * (1/temp)
    o_ref[...] = acc * scale_ref[0] + b_ref[...]


def net_forward(x, weight, bias, temp, *, tile_b=1024):
    """x: (B,1,28,28) or (B,28,28) f32 (NCHW). weight: (10,196). bias: (10,). temp: scalar."""
    x2 = x.reshape(-1, FEAT).astype(jnp.float32)   # free reshape, no extra HBM pass
    B = x2.shape[0]
    tile_b = min(tile_b, B)
    grid = (pl.cdiv(B, tile_b),)

    inv_temp = jnp.reshape(1.0 / jnp.asarray(temp, jnp.float32), (1,))

    # One-time host/wrapper prep (tiny): binarize weights, scatter the 196
    # feature columns onto their pooled-lane rows, pad N to 128, pre-scale bias.
    wb = jnp.where(weight.astype(jnp.float32) >= 0.0, 1.0, -1.0)        # (10, 196)
    f = jnp.arange(POOLED)
    rows = 56 * (f // 14) + 2 * (f % 14)                                # (196,)
    w_small = jnp.zeros((K_SPREAD, N_OUT), jnp.float32).at[rows].set(wb.T)
    w_big = jnp.pad(w_small, ((0, 0), (0, N_PAD - N_OUT))).astype(jnp.bfloat16)

    b_row = jnp.pad((bias.astype(jnp.float32) * inv_temp).reshape(1, N_OUT),
                    ((0, 0), (0, N_PAD - N_OUT)))                       # (1, 128)

    out = pl.pallas_call(
        net_kernel,
        out_shape=jax.ShapeDtypeStruct((B, N_PAD), jnp.float32),
        grid=grid,
        in_specs=[
            pl.BlockSpec(memory_space=pltpu.MemorySpace.SMEM),           # 1/temp scalar
            pl.BlockSpec((tile_b, FEAT), lambda i: (i, 0)),              # image tiles (pipelined)
            pl.BlockSpec((K_SPREAD, N_PAD), lambda i: (0, 0)),           # weight (resident)
            pl.BlockSpec((1, N_PAD), lambda i: (0, 0)),                  # scaled bias (resident)
        ],
        out_specs=pl.BlockSpec((tile_b, N_PAD), lambda i: (i, 0)),
        compiler_params=pltpu.CompilerParams(
            dimension_semantics=("parallel",)),
    )(inv_temp, x2, w_big, b_row)
    return out[:, :N_OUT]


def net_forward_ref(x, weight, bias, temp):
    """Pure-JAX reference for correctness checking."""
    xi = x.reshape(-1, 28, 28).astype(jnp.float32)
    B = xi.shape[0]
    pooled = jnp.max(xi.reshape(B, 14, 2, 14, 2), axis=(2, 4)).reshape(B, POOLED)
    xb = jnp.where(pooled > 0.0, 1.0, -1.0)
    wb = jnp.where(weight >= 0.0, 1.0, -1.0).astype(jnp.float32)
    return (xb @ wb.T + bias) / temp


if __name__ == "__main__":
    key = jax.random.PRNGKey(0)
    kx, kw, kb = jax.random.split(key, 3)

    B = 2
    x = jax.random.normal(kx, (B, 1, 28, 28), dtype=jnp.float32)
    weight = 0.1 * jax.random.normal(kw, (10, POOLED), dtype=jnp.float32)
    bias = 0.01 * jax.random.normal(kb, (10,), dtype=jnp.float32)
    temp = jnp.float32(1.0)   # nn.Parameter(torch.tensor(1.0))

    out = jax.block_until_ready(net_forward(x, weight, bias, temp))
    ref = net_forward_ref(x, weight, bias, temp)
    assert out.shape == (B, 10)
    assert jnp.allclose(out, ref, atol=1e-5, rtol=1e-5), "mismatch vs reference"

    # Also exercise the multi-tile pipelined path (grid > 1) once.
    B2 = 2048
    x_big = jax.random.normal(kx, (B2, 1, 28, 28), dtype=jnp.float32)
    out2 = jax.block_until_ready(net_forward(x_big, weight, bias, temp))
    ref2 = net_forward_ref(x_big, weight, bias, temp)
    assert out2.shape == (B2, 10)
    assert jnp.allclose(out2, ref2, atol=1e-5, rtol=1e-5), "mismatch vs reference (tiled)"

    print("KERNEL_OK")
</pallas_src>

<mosaic_0001>
module attributes {stable_mosaic.version = 11 : i64} {
  func.func @net_kernel(%arg0: i32, %arg1: memref<1xf32, #tpu.memory_space<smem>>, %arg2: memref<2x784xf32, #tpu.memory_space<vmem>>, %arg3: memref<755x128xbf16, #tpu.memory_space<vmem>>, %arg4: memref<1x128xf32, #tpu.memory_space<vmem>>, %arg5: memref<2x128xf32, #tpu.memory_space<vmem>>) attributes {dimension_semantics = [#tpu.dimension_semantics<parallel>], iteration_bounds = array<i64: 1>, scalar_prefetch = 0 : i64, scratch_operands = 0 : i64, tpu.core_type = #tpu.core_type<tc>, window_params = [{transform_indices = @transform_0, window_bounds = array<i64: 1>}, {transform_indices = @transform_1, window_bounds = array<i64: 2, 784>}, {pipeline_mode = #tpu.pipeline_mode<synchronous>, transform_indices = @transform_2, window_bounds = array<i64: 755, 128>}, {pipeline_mode = #tpu.pipeline_mode<synchronous>, transform_indices = @transform_3, window_bounds = array<i64: 1, 128>}, {transform_indices = @transform_4, window_bounds = array<i64: 2, 128>}]} {
    %c0 = arith.constant 0 : index
    %c0_0 = arith.constant 0 : index
    %0 = vector.load %arg2[%c0, %c0_0] : memref<2x784xf32, #tpu.memory_space<vmem>>, vector<2x755xf32>
    %c0_1 = arith.constant 0 : index
    %c1 = arith.constant 1 : index
    %1 = vector.load %arg2[%c0_1, %c1] : memref<2x784xf32, #tpu.memory_space<vmem>>, vector<2x755xf32>
    %c0_2 = arith.constant 0 : index
    %c28 = arith.constant 28 : index
    %2 = vector.load %arg2[%c0_2, %c28] : memref<2x784xf32, #tpu.memory_space<vmem>>, vector<2x755xf32>
    %c0_3 = arith.constant 0 : index
    %c29 = arith.constant 29 : index
    %3 = vector.load %arg2[%c0_3, %c29] : memref<2x784xf32, #tpu.memory_space<vmem>>, vector<2x755xf32>
    %4 = arith.maximumf %0, %1 : vector<2x755xf32>
    %5 = arith.maximumf %2, %3 : vector<2x755xf32>
    %6 = arith.maximumf %4, %5 : vector<2x755xf32>
    %cst = arith.constant 0.000000e+00 : f32
    %7 = vector.broadcast %cst : f32 to vector<2x755xf32>
    %8 = arith.cmpf ogt, %6, %7 : vector<2x755xf32>
    %cst_4 = arith.constant 1.000000e+00 : f32
    %cst_5 = arith.constant -1.000000e+00 : f32
    %9 = vector.broadcast %cst_4 : f32 to vector<2x755xf32>
    %10 = vector.broadcast %cst_5 : f32 to vector<2x755xf32>
    %11 = arith.select %8, %9, %10 : vector<2x755xi1>, vector<2x755xf32>
    %12 = arith.truncf %11 : vector<2x755xf32> to vector<2x755xbf16>
    %c0_6 = arith.constant 0 : index
    %c0_7 = arith.constant 0 : index
    %13 = vector.load %arg3[%c0_6, %c0_7] : memref<755x128xbf16, #tpu.memory_space<vmem>>, vector<755x128xbf16>
    %cst_8 = arith.constant dense<0.000000e+00> : vector<2x128xf32>
    %14 = tpu.matmul %12, %13, %cst_8 {dimension_numbers = #tpu.dot_dimension_numbers<[1], [0], [0], [1], [0, 0, 1, 1], [], []>} : vector<2x755xbf16>, vector<755x128xbf16>, vector<2x128xf32> -> vector<2x128xf32>
    %c0_9 = arith.constant 0 : index
    %15 = memref.load %arg1[%c0_9] : memref<1xf32, #tpu.memory_space<smem>>
    %16 = vector.broadcast %15 : f32 to vector<2x128xf32>
    %17 = arith.mulf %14, %16 : vector<2x128xf32>
    %c0_10 = arith.constant 0 : index
    %c0_11 = arith.constant 0 : index
    %18 = vector.load %arg4[%c0_10, %c0_11] : memref<1x128xf32, #tpu.memory_space<vmem>>, vector<1x128xf32>
    %19 = vector.broadcast %18 : vector<1x128xf32> to vector<2x128xf32>
    %20 = arith.addf %17, %19 : vector<2x128xf32>
    %c0_12 = arith.constant 0 : index
    %c0_13 = arith.constant 0 : index
    %21 = vector.load %arg5[%c0_12, %c0_13] : memref<2x128xf32, #tpu.memory_space<vmem>>, vector<2x128xf32>
    tpu.vector_store %arg5[%c0_12, %c0_13], %20 {strides = array<i32>} : memref<2x128xf32, #tpu.memory_space<vmem>>, vector<2x128xf32>,
    return
  }
  func.func @transform_0(%arg0: i32) -> i32 {
    %c0_i32 = arith.constant 0 : i32
    %c0_i32_0 = arith.constant 0 : i32
    return %c0_i32 : i32
  }
  func.func @transform_1(%arg0: i32) -> (i32, i32) {
    %c0_i32 = arith.constant 0 : i32
    %c0_i32_0 = arith.constant 0 : i32
    return %arg0, %c0_i32 : i32, i32
  }
  func.func @transform_2(%arg0: i32) -> (i32, i32) {
    %c0_i32 = arith.constant 0 : i32
    %c0_i32_0 = arith.constant 0 : i32
    %c0_i32_1 = arith.constant 0 : i32
    return %c0_i32, %c0_i32_0 : i32, i32
  }
  func.func @transform_3(%arg0: i32) -> (i32, i32) {
    %c0_i32 = arith.constant 0 : i32
    %c0_i32_0 = arith.constant 0 : i32
    %c0_i32_1 = arith.constant 0 : i32
    return %c0_i32, %c0_i32_0 : i32, i32
  }
  func.func @transform_4(%arg0: i32) -> (i32, i32) {
    %c0_i32 = arith.constant 0 : i32
    %c0_i32_0 = arith.constant 0 : i32
    return %arg0, %c0_i32 : i32, i32
  }
}

</mosaic_0001>

<llo_original>
// kernel: tpu_custom_call.1
$region0: #{tpu_custom_call.1}
  #allocation0 [shape = 'u32[]', space=smem, size = 0x4, offset = 0x4, fixed_abs, tag = 'smem constant byte address 0x4 - core index']
  #allocation1 [shape = 'u32[144,128]{1,0:T(1,128)}', space=vmem, size = 0x12000, scoped, tag = 'internal scratch']
  #allocation2 [shape = 'f32[1]{0:T(128)S(6)}', space=smem, size = 0x200, scoped, tag = 'scoped memory for tpu_custom_call.1']
  %s0 = inlined_call_operand.<no memory space> [shape: f32[1], index: 0, kind: input, shape index: {}]
  %s1 = inlined_call_operand.hbm [shape: f32[2,784], index: 1, kind: input, shape index: {}]
  %s2 = inlined_call_operand.hbm [shape: bf16[755,128], index: 2, kind: input, shape index: {}]
  %s3 = inlined_call_operand.vmem [shape: f32[1,128], index: 3, kind: input, shape index: {}]
  %s4 = inlined_call_operand.hbm [shape: f32[2,128], index: 4, kind: output, shape index: {}]
  %s5 = sld [smem:[#allocation0]]
  $region34: #{tpu_custom_call.1} parent=0
    _
  %s7 = ssub.s32 1, %s5
  %s8 = scalar_select 0, %s7, %s5
  %9 = sst [smem:[#allocation2]] %s0
  $region1: #{tpu_custom_call.1} parent=0
    #allocation3 [shape = 'u8[7168]{0}', space=vmem, size = 0x1c00, scoped, tag = 'input window, operand 1, single buffered']
    #allocation4 [shape = 's32[1]{0}', space=sflag, size = 0x4, scoped, tag = 'scoped memory for tpu_custom_call.1']
    #allocation5 [shape = 's32[1]{0}', space=sflag, size = 0x4, scoped, tag = 'scoped memory for tpu_custom_call.1']
    #allocation6 [shape = 'u8[194560]{0}', space=vmem, size = 0x2f800, scoped, tag = 'input window, operand 2, single buffered']
    #allocation7 [shape = 's32[1]{0}', space=sflag, size = 0x4, scoped, tag = 'scoped memory for tpu_custom_call.1']
    #allocation8 [shape = 'u8[1024]{0}', space=vmem, size = 0x400, scoped, tag = 'output window, operand 0, single buffered']
    %10 = vsyncpa [#allocation4], 0
    %11 = vsyncpa [#allocation7], 0
    %12 = vsyncpa [#allocation5], 0
    // Predicated region
    $region2: #{tpu_custom_call.1} parent=1 // pred_check
      _
    $region3: #{tpu_custom_call.1} parent=1 // pred_check_branch
      %14 = sbr.rel (0) target = $region5
    $region4: #{tpu_custom_call.1} parent=1 // pred_region
      _
    $region5: #{tpu_custom_call.1} parent=1 // pred_fallthru
      _
    // Predicated region
    $region6: #{tpu_custom_call.1} parent=1 // pred_check
      _
    $region7: #{tpu_custom_call.1} parent=1 // pred_check_branch
      %16 = sbr.rel (0) target = $region9
    $region8: #{tpu_custom_call.1} parent=1 // pred_region
      %s18 = ssub.s32 224, 224
      %19 = vsyncadd [#allocation4], %s18
      %s21 = sshll.u32 [#allocation3], 4
      %s22 = int_to_ptr.vmem [resolvable:$true] %s21
      %24 = dma.hbm_to_vmem [thread:$0]  %s1, 224, %s22, [#allocation4]
    $region9: #{tpu_custom_call.1} parent=1 // pred_fallthru
      _
    // Predicated region
    $region10: #{tpu_custom_call.1} parent=1 // pred_check
      _
    $region11: #{tpu_custom_call.1} parent=1 // pred_check_branch
      %26 = sbr.rel (0) target = $region13
    $region12: #{tpu_custom_call.1} parent=1 // pred_region
      %s28 = ssub.s32 6080, 6080
      %29 = vsyncadd [#allocation7], %s28
      %s30 = sshll.u32 [#allocation6], 4
      %s31 = int_to_ptr.vmem [resolvable:$true] %s30
      %36 = dma.hbm_to_vmem [thread:$0]  %s2, 6080, %s31, [#allocation7], 64, 64, 4
    $region13: #{tpu_custom_call.1} parent=1 // pred_fallthru
      _
    // Predicated region
    $region14: #{tpu_custom_call.1} parent=1 // pred_check
      _
    $region15: #{tpu_custom_call.1} parent=1 // pred_check_branch
      %38 = sbr.rel (0) target = $region17
    $region16: #{tpu_custom_call.1} parent=1 // pred_region
      _
    $region17: #{tpu_custom_call.1} parent=1 // pred_fallthru
      _
    // Predicated region
    $region18: #{tpu_custom_call.1} parent=1 // pred_check
      _
    $region19: #{tpu_custom_call.1} parent=1 // pred_check_branch
      %40 = sbr.rel (0) target = $region21
    $region20: #{tpu_custom_call.1} parent=1 // pred_region
      %41 = dma.done [#allocation4], 224
    $region21: #{tpu_custom_call.1} parent=1 // pred_fallthru
      _
    // Predicated region
    $region22: #{tpu_custom_call.1} parent=1 // pred_check
      _
    $region23: #{tpu_custom_call.1} parent=1 // pred_check_branch
      %43 = sbr.rel (0) target = $region25
    $region24: #{tpu_custom_call.1} parent=1 // pred_region
      %44 = dma.done [#allocation7], 6080
    $region25: #{tpu_custom_call.1} parent=1 // pred_fallthru
      _
    %v46 = vld [vmem:[#allocation3] sm:$0xff]
    %v47 = vld [vmem:[#allocation3 + $0x8] sm:$0xf]
    %v48 = vld [vmem:[#allocation3 + $0x8] sm:$0x3f]
    %51 = vrot.lane.b32.xlu0 %v46, 127
    %v52 = vpop.permute.xlu0 %51
    %53 = vrot.lane.b32.xlu0 %v47, 127
    %v54 = vpop.permute.xlu0 %53
    %v55 = vrot.slane %v52, 2
    %v56 = vrot.slane %v54, 2
    %vm57 = vcmask 1045504
    %v58 = vsel %vm57, %v55, %v56
    %vm59 = vcmask 1039360
    %v60 = vsel %vm59, %v52, %v58
    %v61 = vsel %vm59, %v54, %v56
    %v64 = vmax.f32 %v46, %v60
    %v65 = vmax.f32 %v47, %v61
    %67 = vrot.lane.b32.xlu0 %v48, 127
    %v68 = vpop.permute.xlu0 %67
    %v69 = vrot.slane %v68, 2
    %v70 = vsel %vm57, %v55, %v69
    %v71 = vsel %vm59, %v52, %v70
    %v72 = vsel %vm59, %v68, %v69
    %v75 = vmax.f32 %v46, %v71
    %v76 = vmax.f32 %v48, %v72
    %79 = vrot.lane.b32.xlu0 %v75, 100
    %v80 = vpop.permute.xlu0 %79
    %81 = vrot.lane.b32.xlu0 %v76, 100
    %v82 = vpop.permute.xlu0 %81
    %v83 = vrot.slane %v80, 2
    %v84 = vrot.slane %v82, 2
    %v85 = vsel %vm57, %v83, %v84
    %vm86 = vcmask 818176
    %v87 = vsel %vm86, %v80, %v85
    %v88 = vsel %vm86, %v82, %v84
    %v91 = vmax.f32 %v64, %v87
    %v92 = vmax.f32 %v65, %v88
    %vm93 = vcmp.gt.f32.partialorder %v91, 0.0
    %vm94 = vcmp.gt.f32.partialorder %v92, 0.0
    %v95 = vsel %vm93, 1.0, -1.0
    %v96 = vsel %vm94, 1.0, -1.0
    %v99 = vcombine.high %v95, %v95
    %v101 = vunpack.c.l.s4 1983009808
    %v102 = vunpack.c.0.s8 %v101
    %v103 = vlaneseq
    %v104 = vshrl.u32 %v103, 7
    %v105 = vsub.s32 %v102, %v104
    %v106 = vrot.slane %v95, %v105
    %v108 = vunpack.c.l.s4 1983009808
    %v109 = vunpack.c.0.s8 %v108
    %v110 = vlaneseq
    %v111 = vshrl.u32 %v110, 7
    %v112 = vsub.s32 %v109, %v111
    %v113 = vrot.slane %v99, %v112
    %v114 = vcombine.high %v106, %v106
    %v115 = vcombine.high %v113, %v113
    %v117 = vunpack.c.l.s4 1983009808
    %v118 = vunpack.c.0.s8 %v117
    %v119 = vlaneseq
    %v120 = vshrl.u32 %v119, 7
    %v121 = vsub.s32 %v118, %v120
    %v122 = vrot.slane %v96, %v121
    %v123 = vcombine.high %v122, %v122
    %v130 = vpack.c.bf16 %v106, %v106
    %v131 = vpack.c.bf16 %v114, %v114
    %v132 = vpack.c.bf16 %v113, %v113
    %v133 = vpack.c.bf16 %v115, %v115
    %v134 = vpack.c.bf16 %v122, %v122
    %v135 = vpack.c.bf16 %v123, %v123
    %v136 = vld [vmem:[#allocation6] sm:$0xf]
    %v137 = vld [vmem:[#allocation6 + $0x4] sm:$0xf]
    %v138 = vld [vmem:[#allocation6 + $0x8] sm:$0xf]
    %v139 = vld [vmem:[#allocation6 + $0xc] sm:$0xf]
    %v140 = vld [vmem:[#allocation6 + $0x10] sm:$0xf]
    %v141 = vld [vmem:[#allocation6 + $0x14] sm:$0xf]
    %v142 = vld [vmem:[#allocation6 + $0x18] sm:$0xf]
    %v143 = vld [vmem:[#allocation6 + $0x1c] sm:$0xf]
    %v144 = vld [vmem:[#allocation6 + $0x20] sm:$0xf]
    %v145 = vld [vmem:[#allocation6 + $0x24] sm:$0xf]
    %v146 = vld [vmem:[#allocation6 + $0x28] sm:$0xf]
    %v147 = vld [vmem:[#allocation6 + $0x2c] sm:$0xf]
    %v148 = vld [vmem:[#allocation6 + $0x30] sm:$0xf]
    %v149 = vld [vmem:[#allocation6 + $0x34] sm:$0xf]
    %v150 = vld [vmem:[#allocation6 + $0x38] sm:$0xf]
    %v151 = vld [vmem:[#allocation6 + $0x3c] sm:$0xf]
    %v152 = vld [vmem:[#allocation6 + $0x40] sm:$0xf]
    %v153 = vld [vmem:[#allocation6 + $0x44] sm:$0xf]
    %v154 = vld [vmem:[#allocation6 + $0x48] sm:$0xf]
    %v155 = vld [vmem:[#allocation6 + $0x4c] sm:$0xf]
    %v156 = vld [vmem:[#allocation6 + $0x50] sm:$0xf]
    %v157 = vld [vmem:[#allocation6 + $0x54] sm:$0xf]
    %v158 = vld [vmem:[#allocation6 + $0x58] sm:$0xf]
    %v159 = vld [vmem:[#allocation6 + $0x5c] sm:$0xf]
    %v160 = vld [vmem:[#allocation6 + $0x60] sm:$0xf]
    %v161 = vld [vmem:[#allocation6 + $0x64] sm:$0xf]
    %v162 = vld [vmem:[#allocation6 + $0x68] sm:$0xf]
    %v163 = vld [vmem:[#allocation6 + $0x6c] sm:$0xf]
    %v164 = vld [vmem:[#allocation6 + $0x70] sm:$0xf]
    %v165 = vld [vmem:[#allocation6 + $0x74] sm:$0xf]
    %v166 = vld [vmem:[#allocation6 + $0x78] sm:$0xf]
    %v167 = vld [vmem:[#allocation6 + $0x7c] sm:$0xf]
    %v168 = vld [vmem:[#allocation6 + $0x80] sm:$0xf]
    %v169 = vld [vmem:[#allocation6 + $0x84] sm:$0xf]
    %v170 = vld [vmem:[#allocation6 + $0x88] sm:$0xf]
    %v171 = vld [vmem:[#allocation6 + $0x8c] sm:$0xf]
    %v172 = vld [vmem:[#allocation6 + $0x90] sm:$0xf]
    %v173 = vld [vmem:[#allocation6 + $0x94] sm:$0xf]
    %v174 = vld [vmem:[#allocation6 + $0x98] sm:$0xf]
    %v175 = vld [vmem:[#allocation6 + $0x9c] sm:$0xf]
    %v176 = vld [vmem:[#allocation6 + $0xa0] sm:$0xf]
    %v177 = vld [vmem:[#allocation6 + $0xa4] sm:$0xf]
    %v178 = vld [vmem:[#allocation6 + $0xa8] sm:$0xf]
    %v179 = vld [vmem:[#allocation6 + $0xac] sm:$0xf]
    %v180 = vld [vmem:[#allocation6 + $0xb0] sm:$0xf]
    %v181 = vld [vmem:[#allocation6 + $0xb4] sm:$0xf]
    %v182 = vld [vmem:[#allocation6 + $0xb8] sm:$0xf]
    %v183 = vld [vmem:[#allocation6 + $0xbc] sm:$0xf]
    %v184 = vld [vmem:[#allocation6 + $0xc0] sm:$0xf]
    %v185 = vld [vmem:[#allocation6 + $0xc4] sm:$0xf]
    %v186 = vld [vmem:[#allocation6 + $0xc8] sm:$0xf]
    %v187 = vld [vmem:[#allocation6 + $0xcc] sm:$0xf]
    %v188 = vld [vmem:[#allocation6 + $0xd0] sm:$0xf]
    %v189 = vld [vmem:[#allocation6 + $0xd4] sm:$0xf]
    %v190 = vld [vmem:[#allocation6 + $0xd8] sm:$0xf]
    %v191 = vld [vmem:[#allocation6 + $0xdc] sm:$0xf]
    %v192 = vld [vmem:[#allocation6 + $0xe0] sm:$0xf]
    %v193 = vld [vmem:[#allocation6 + $0xe4] sm:$0xf]
    %v194 = vld [vmem:[#allocation6 + $0xe8] sm:$0xf]
    %v195 = vld [vmem:[#allocation6 + $0xec] sm:$0xf]
    %v196 = vld [vmem:[#allocation6 + $0xf0] sm:$0xf]
    %v197 = vld [vmem:[#allocation6 + $0xf4] sm:$0xf]
    %v198 = vld [vmem:[#allocation6 + $0xf8] sm:$0xf]
    %v199 = vld [vmem:[#allocation6 + $0xfc] sm:$0xf]
    %v200 = vld [vmem:[#allocation6 + $0x100] sm:$0xf]
    %v201 = vld [vmem:[#allocation6 + $0x104] sm:$0xf]
    %v202 = vld [vmem:[#allocation6 + $0x108] sm:$0xf]
    %v203 = vld [vmem:[#allocation6 + $0x10c] sm:$0xf]
    %v204 = vld [vmem:[#allocation6 + $0x110] sm:$0xf]
    %v205 = vld [vmem:[#allocation6 + $0x114] sm:$0xf]
    %v206 = vld [vmem:[#allocation6 + $0x118] sm:$0xf]
    %v207 = vld [vmem:[#allocation6 + $0x11c] sm:$0xf]
    %v208 = vld [vmem:[#allocation6 + $0x120] sm:$0xf]
    %v209 = vld [vmem:[#allocation6 + $0x124] sm:$0xf]
    %v210 = vld [vmem:[#allocation6 + $0x128] sm:$0xf]
    %v211 = vld [vmem:[#allocation6 + $0x12c] sm:$0xf]
    %v212 = vld [vmem:[#allocation6 + $0x130] sm:$0xf]
    %v213 = vld [vmem:[#allocation6 + $0x134] sm:$0xf]
    %v214 = vld [vmem:[#allocation6 + $0x138] sm:$0xf]
    %v215 = vld [vmem:[#allocation6 + $0x13c] sm:$0xf]
    %v216 = vld [vmem:[#allocation6 + $0x140] sm:$0xf]
    %v217 = vld [vmem:[#allocation6 + $0x144] sm:$0xf]
    %v218 = vld [vmem:[#allocation6 + $0x148] sm:$0xf]
    %v219 = vld [vmem:[#allocation6 + $0x14c] sm:$0xf]
    %v220 = vld [vmem:[#allocation6 + $0x150] sm:$0xf]
    %v221 = vld [vmem:[#allocation6 + $0x154] sm:$0xf]
    %v222 = vld [vmem:[#allocation6 + $0x158] sm:$0xf]
    %v223 = vld [vmem:[#allocation6 + $0x15c] sm:$0xf]
    %v224 = vld [vmem:[#allocation6 + $0x160] sm:$0xf]
    %v225 = vld [vmem:[#allocation6 + $0x164] sm:$0xf]
    %v226 = vld [vmem:[#allocation6 + $0x168] sm:$0xf]
    %v227 = vld [vmem:[#allocation6 + $0x16c] sm:$0xf]
    %v228 = vld [vmem:[#allocation6 + $0x170] sm:$0xf]
    %v229 = vld [vmem:[#allocation6 + $0x174] sm:$0xf]
    %v230 = vld [vmem:[#allocation6 + $0x178] sm:$0x3]
    %v326 = vunpack.c.l.b16 %v136
    %v327 = vunpack.c.l.b16 %v137
    %v328 = vunpack.c.l.b16 %v138
    %v329 = vunpack.c.l.b16 %v139
    %v330 = vunpack.c.l.b16 %v140
    %v331 = vunpack.c.l.b16 %v141
    %v332 = vunpack.c.l.b16 %v142
    %v333 = vunpack.c.l.b16 %v143
    %v334 = vunpack.c.l.b16 %v144
    %v335 = vunpack.c.l.b16 %v145
    %v336 = vunpack.c.l.b16 %v146
    %v337 = vunpack.c.l.b16 %v147
    %v338 = vunpack.c.l.b16 %v148
    %v339 = vunpack.c.l.b16 %v149
    %v340 = vunpack.c.l.b16 %v150
    %v341 = vunpack.c.l.b16 %v151
    %v342 = vunpack.c.l.b16 %v152
    %v343 = vunpack.c.l.b16 %v153
    %v344 = vunpack.c.l.b16 %v154
    %v345 = vunpack.c.l.b16 %v155
    %v346 = vunpack.c.l.b16 %v156
    %v347 = vunpack.c.l.b16 %v157
    %v348 = vunpack.c.l.b16 %v158
    %v349 = vunpack.c.l.b16 %v159
    %v350 = vunpack.c.l.b16 %v160
    %v351 = vunpack.c.l.b16 %v161
    %v352 = vunpack.c.l.b16 %v162
    %v353 = vunpack.c.l.b16 %v163
    %v354 = vunpack.c.l.b16 %v164
    %v355 = vunpack.c.l.b16 %v165
    %v356 = vunpack.c.l.b16 %v166
    %v357 = vunpack.c.l.b16 %v167
    %v358 = vunpack.c.l.b16 %v168
    %v359 = vunpack.c.l.b16 %v169
    %v360 = vunpack.c.l.b16 %v170
    %v361 = vunpack.c.l.b16 %v171
    %v362 = vunpack.c.l.b16 %v172
    %v363 = vunpack.c.l.b16 %v173
    %v364 = vunpack.c.l.b16 %v174
    %v365 = vunpack.c.l.b16 %v175
    %v366 = vunpack.c.l.b16 %v176
    %v367 = vunpack.c.l.b16 %v177
    %v368 = vunpack.c.l.b16 %v178
    %v369 = vunpack.c.l.b16 %v179
    %v370 = vunpack.c.l.b16 %v180
    %v371 = vunpack.c.l.b16 %v181
    %v372 = vunpack.c.l.b16 %v182
    %v373 = vunpack.c.l.b16 %v183
    %v374 = vunpack.c.l.b16 %v184
    %v375 = vunpack.c.l.b16 %v185
    %v376 = vunpack.c.l.b16 %v186
    %v377 = vunpack.c.l.b16 %v187
    %v378 = vunpack.c.l.b16 %v188
    %v379 = vunpack.c.l.b16 %v189
    %v380 = vunpack.c.l.b16 %v190
    %v381 = vunpack.c.l.b16 %v191
    %v382 = vunpack.c.l.b16 %v192
    %v383 = vunpack.c.l.b16 %v193
    %v384 = vunpack.c.l.b16 %v194
    %v385 = vunpack.c.l.b16 %v195
    %v386 = vunpack.c.l.b16 %v196
    %v387 = vunpack.c.l.b16 %v197
    %v388 = vunpack.c.l.b16 %v198
    %v389 = vunpack.c.l.b16 %v199
    %v390 = vunpack.c.l.b16 %v200
    %v391 = vunpack.c.l.b16 %v201
    %v392 = vunpack.c.l.b16 %v202
    %v393 = vunpack.c.l.b16 %v203
    %v394 = vunpack.c.l.b16 %v204
    %v395 = vunpack.c.l.b16 %v205
    %v396 = vunpack.c.l.b16 %v206
    %v397 = vunpack.c.l.b16 %v207
    %v398 = vunpack.c.l.b16 %v208
    %v399 = vunpack.c.l.b16 %v209
    %v400 = vunpack.c.l.b16 %v210
    %v401 = vunpack.c.l.b16 %v211
    %v402 = vunpack.c.l.b16 %v212
    %v403 = vunpack.c.l.b16 %v213
    %v404 = vunpack.c.l.b16 %v214
    %v405 = vunpack.c.l.b16 %v215
    %v406 = vunpack.c.l.b16 %v216
    %v407 = vunpack.c.l.b16 %v217
    %v408 = vunpack.c.l.b16 %v218
    %v409 = vunpack.c.l.b16 %v219
    %v410 = vunpack.c.l.b16 %v220
    %v411 = vunpack.c.l.b16 %v221
    %v412 = vunpack.c.l.b16 %v222
    %v413 = vunpack.c.l.b16 %v223
    %v414 = vunpack.c.l.b16 %v224
    %v415 = vunpack.c.l.b16 %v225
    %v416 = vunpack.c.l.b16 %v226
    %v417 = vunpack.c.l.b16 %v227
    %v418 = vunpack.c.l.b16 %v228
    %v419 = vunpack.c.l.b16 %v229
    %v420 = vunpack.c.l.b16 %v230
    %v421 = vpack.c.b16 %v327, %v326
    %v422 = vpack.c.b16 %v329, %v328
    %v423 = vpack.c.b16 %v331, %v330
    %v424 = vpack.c.b16 %v333, %v332
    %v425 = vpack.c.b16 %v335, %v334
    %v426 = vpack.c.b16 %v337, %v336
    %v427 = vpack.c.b16 %v339, %v338
    %v428 = vpack.c.b16 %v341, %v340
    %v429 = vpack.c.b16 %v343, %v342
    %v430 = vpack.c.b16 %v345, %v344
    %v431 = vpack.c.b16 %v347, %v346
    %v432 = vpack.c.b16 %v349, %v348
    %v433 = vpack.c.b16 %v351, %v350
    %v434 = vpack.c.b16 %v353, %v352
    %v435 = vpack.c.b16 %v355, %v354
    %v436 = vpack.c.b16 %v357, %v356
    %v437 = vpack.c.b16 %v359, %v358
    %v438 = vpack.c.b16 %v361, %v360
    %v439 = vpack.c.b16 %v363, %v362
    %v440 = vpack.c.b16 %v365, %v364
    %v441 = vpack.c.b16 %v367, %v366
    %v442 = vpack.c.b16 %v369, %v368
    %v443 = vpack.c.b16 %v371, %v370
    %v444 = vpack.c.b16 %v373, %v372
    %v445 = vpack.c.b16 %v375, %v374
    %v446 = vpack.c.b16 %v377, %v376
    %v447 = vpack.c.b16 %v379, %v378
    %v448 = vpack.c.b16 %v381, %v380
    %v449 = vpack.c.b16 %v383, %v382
    %v450 = vpack.c.b16 %v385, %v384
    %v451 = vpack.c.b16 %v387, %v386
    %v452 = vpack.c.b16 %v389, %v388
    %v453 = vpack.c.b16 %v391, %v390
    %v454 = vpack.c.b16 %v393, %v392
    %v455 = vpack.c.b16 %v395, %v394
    %v456 = vpack.c.b16 %v397, %v396
    %v457 = vpack.c.b16 %v399, %v398
    %v458 = vpack.c.b16 %v401, %v400
    %v459 = vpack.c.b16 %v403, %v402
    %v460 = vpack.c.b16 %v405, %v404
    %v461 = vpack.c.b16 %v407, %v406
    %v462 = vpack.c.b16 %v409, %v408
    %v463 = vpack.c.b16 %v411, %v410
    %v464 = vpack.c.b16 %v413, %v412
    %v465 = vpack.c.b16 %v415, %v414
    %v466 = vpack.c.b16 %v417, %v416
    %v467 = vpack.c.b16 %v419, %v418
    %v468 = vpack.c.b16 %v420, %v420
    %vm516 = vcmask 941056
    %v518 = vsel %vm516, %v135, 0
    %vm520 = vcmask 1040384
    %vm521 = vcmask 1041408
    %v522 = vsel %vm520, 4294967295, 65535
    %v523 = vsel %vm521, %v522, 0
    %v525 = vand.u32 %v468, %v523
    %527 = vmatprep.subr.bf16.mxu0 0
    %528 = vmatpush1.bf16.msra.mxu0 %v428
    %529 = vmatprep.subr.bf16.mxu0 0
    %530 = vmatpush1.bf16.msra.mxu0 %v427
    %531 = vmatprep.subr.bf16.mxu0 0
    %532 = vmatpush1.bf16.msra.mxu0 %v426
    %533 = vmatprep.subr.bf16.mxu0 0
    %534 = vmatpush1.bf16.msra.mxu0 %v425
    %535 = vmatprep.subr.bf16.mxu0 0
    %536 = vmatpush1.bf16.msra.mxu0 %v424
    %537 = vmatprep.subr.bf16.mxu0 0
    %538 = vmatpush1.bf16.msra.mxu0 %v423
    %539 = vmatprep.subr.bf16.mxu0 0
    %540 = vmatpush1.bf16.msra.mxu0 %v422
    %541 = vmatprep.subr.bf16.mxu0 0
    %542 = vmatpush1.bf16.msra.mxu0 %v421
    %543 = vmatprep.subr.bf16.mxu0 0
    %544 = vmatpush2.bf16.msra.mxu0 %v436
    %545 = vmatprep.subr.bf16.mxu0 0
    %546 = vmatpush2.bf16.msra.mxu0 %v435
    %547 = vmatprep.subr.bf16.mxu0 0
    %548 = vmatpush2.bf16.msra.mxu0 %v434
    %549 = vmatprep.subr.bf16.mxu0 0
    %550 = vmatpush2.bf16.msra.mxu0 %v433
    %551 = vmatprep.subr.bf16.mxu0 0
    %552 = vmatpush2.bf16.msra.mxu0 %v432
    %553 = vmatprep.subr.bf16.mxu0 0
    %554 = vmatpush2.bf16.msra.mxu0 %v431
    %555 = vmatprep.subr.bf16.mxu0 0
    %556 = vmatpush2.bf16.msra.mxu0 %v430
    %557 = vmatprep.subr.bf16.mxu0 0
    %558 = vmatpush2.bf16.msra.mxu0 %v429
    %559 = vmatprep.mubr.bf16.mxu0 %v131
    %560 = vmatmul.mubr.bf16.gmra.mxu0 %v130
    %v561 = vpop.f32.mrf.mxu0
    %v562 = vadd.f32 0.0, %v561
    %v563 = vpop.f32.mrf.mxu0
    %v564 = vpop.f32.mrf.mxu0
    %v565 = vpop.f32.mrf.mxu0
    %566 = vdwg.mxu0
    %567 = vmatprep.subr.bf16.mxu0 0
    %568 = vmatpush1.bf16.msra.mxu0 %v444
    %569 = vmatprep.subr.bf16.mxu0 0
    %570 = vmatpush1.bf16.msra.mxu0 %v443
    %571 = vmatprep.subr.bf16.mxu0 0
    %572 = vmatpush1.bf16.msra.mxu0 %v442
    %573 = vmatprep.subr.bf16.mxu0 0
    %574 = vmatpush1.bf16.msra.mxu0 %v441
    %575 = vmatprep.subr.bf16.mxu0 0
    %576 = vmatpush1.bf16.msra.mxu0 %v440
    %577 = vmatprep.subr.bf16.mxu0 0
    %578 = vmatpush1.bf16.msra.mxu0 %v439
    %579 = vmatprep.subr.bf16.mxu0 0
    %580 = vmatpush1.bf16.msra.mxu0 %v438
    %581 = vmatprep.subr.bf16.mxu0 0
    %582 = vmatpush1.bf16.msra.mxu0 %v437
    %583 = vmatprep.subr.bf16.mxu0 0
    %584 = vmatpush2.bf16.msra.mxu0 %v452
    %585 = vmatprep.subr.bf16.mxu0 0
    %586 = vmatpush2.bf16.msra.mxu0 %v451
    %587 = vmatprep.subr.bf16.mxu0 0
    %588 = vmatpush2.bf16.msra.mxu0 %v450
    %589 = vmatprep.subr.bf16.mxu0 0
    %590 = vmatpush2.bf16.msra.mxu0 %v449
    %591 = vmatprep.subr.bf16.mxu0 0
    %592 = vmatpush2.bf16.msra.mxu0 %v448
    %593 = vmatprep.subr.bf16.mxu0 0
    %594 = vmatpush2.bf16.msra.mxu0 %v447
    %595 = vmatprep.subr.bf16.mxu0 0
    %596 = vmatpush2.bf16.msra.mxu0 %v446
    %597 = vmatprep.subr.bf16.mxu0 0
    %598 = vmatpush2.bf16.msra.mxu0 %v445
    %599 = vmatprep.mubr.bf16.mxu0 %v133
    %600 = vmatmul.mubr.bf16.gmra.mxu0 %v132
    %v601 = vpop.f32.mrf.mxu0
    %v602 = vadd.f32 %v562, %v601
    %v603 = vpop.f32.mrf.mxu0
    %v604 = vpop.f32.mrf.mxu0
    %v605 = vpop.f32.mrf.mxu0
    %606 = vdwg.mxu0
    %607 = vmatprep.subr.bf16.mxu0 0
    %608 = vmatpush1.bf16.msra.mxu0 %v460
    %609 = vmatprep.subr.bf16.mxu0 0
    %610 = vmatpush1.bf16.msra.mxu0 %v459
    %611 = vmatprep.subr.bf16.mxu0 0
    %612 = vmatpush1.bf16.msra.mxu0 %v458
    %613 = vmatprep.subr.bf16.mxu0 0
    %614 = vmatpush1.bf16.msra.mxu0 %v457
    %615 = vmatprep.subr.bf16.mxu0 0
    %616 = vmatpush1.bf16.msra.mxu0 %v456
    %617 = vmatprep.subr.bf16.mxu0 0
    %618 = vmatpush1.bf16.msra.mxu0 %v455
    %619 = vmatprep.subr.bf16.mxu0 0
    %620 = vmatpush1.bf16.msra.mxu0 %v454
    %621 = vmatprep.subr.bf16.mxu0 0
    %622 = vmatpush1.bf16.msra.mxu0 %v453
    %623 = vmatprep.subr.bf16.mxu0 0
    %624 = vmatpush2.bf16.msra.mxu0 %v525
    %625 = vmatprep.subr.bf16.mxu0 0
    %626 = vmatpush2.bf16.msra.mxu0 %v467
    %627 = vmatprep.subr.bf16.mxu0 0
    %628 = vmatpush2.bf16.msra.mxu0 %v466
    %629 = vmatprep.subr.bf16.mxu0 0
    %630 = vmatpush2.bf16.msra.mxu0 %v465
    %631 = vmatprep.subr.bf16.mxu0 0
    %632 = vmatpush2.bf16.msra.mxu0 %v464
    %633 = vmatprep.subr.bf16.mxu0 0
    %634 = vmatpush2.bf16.msra.mxu0 %v463
    %635 = vmatprep.subr.bf16.mxu0 0
    %636 = vmatpush2.bf16.msra.mxu0 %v462
    %637 = vmatprep.subr.bf16.mxu0 0
    %638 = vmatpush2.bf16.msra.mxu0 %v461
    %639 = vmatprep.mubr.bf16.mxu0 %v518
    %640 = vmatmul.mubr.bf16.gmra.mxu0 %v134
    %v641 = vpop.f32.mrf.mxu0
    %v642 = vadd.f32 %v602, %v641
    %v643 = vpop.f32.mrf.mxu0
    %v644 = vpop.f32.mrf.mxu0
    %v645 = vpop.f32.mrf.mxu0
    %646 = vdwg.mxu0
    %s647 = sld [smem:[#allocation2]]
    %v648 = vstv %s647
    %v649 = vmul.f32 %v642, %v648
    %v650 = vld [vmem:[%s3] sm:$0x1]
    %v652 = vlaneseq
    %v653 = vshrl.u32 %v652, 7
    %v654 = vsub.s32 0, %v653
    %v655 = vrot.slane %v650, %v654
    %v657 = vadd.f32 %v649, %v655
    %658 = vst [vmem:[#allocation8] sm:$0x3] %v657
    // Predicated region
    $region26: #{tpu_custom_call.1} parent=1 // pred_check
      _
    $region27: #{tpu_custom_call.1} parent=1 // pred_check_branch
      %660 = sbr.rel (0) target = $region29
    $region28: #{tpu_custom_call.1} parent=1 // pred_region
      %s662 = ssub.s32 32, 32
      %663 = vsyncadd [#allocation5], %s662
      %s665 = sshll.u32 [#allocation8], 4
      %s666 = int_to_ptr.vmem [resolvable:$true] %s665
      %668 = dma.vmem_to_hbm [thread:$0]  %s666, 32, %s4, [#allocation5]
    $region29: #{tpu_custom_call.1} parent=1 // pred_fallthru
      _
    // Predicated region
    $region30: #{tpu_custom_call.1} parent=1 // pred_check
      _
    $region31: #{tpu_custom_call.1} parent=1 // pred_check_branch
      %670 = sbr.rel (0) target = $region33
    $region32: #{tpu_custom_call.1} parent=1 // pred_region
      %671 = dma.done [#allocation5], 32
    $region33: #{tpu_custom_call.1} parent=1 // pred_fallthru
      _
    %672 = vsyncpa [#allocation4], 1
    %673 = vsyncpa [#allocation7], 1
    %674 = vsyncpa [#allocation5], 1

</llo_original>
